<compile_context>
chip_gen: v7x
topology: tpu7x:2x2x1
jax: 0.10.0
libtpu: 0.0.40
codegen_flags: <defaults>
</compile_context>

<pallas_src>
import functools

import jax
import jax.numpy as jnp
from jax import lax
from jax.experimental import pallas as pl
from jax.experimental.pallas import tpu as pltpu


def _vmem_capacity_bytes():
    """Physical VMEM of the current chip (64 MiB v7x, 128 MiB v5e/v6e)."""
    try:
        return int(pltpu.get_tpu_info().vmem_capacity_bytes)
    except Exception:
        return 64 * 1024 * 1024  # conservative (v7x-sized) fallback


def _triplet_loss_kernel(a_ref, p_ref, n_ref, out_ref, *, margin, block_b,
                         batch, masked, use_mxu_reduce):
    """One batch tile -> one lane-dense partial-sum row.

    a_ref/p_ref/n_ref : (block_b, D) VMEM tiles (upcast to f32 for the math)
    out_ref           : (1, 1, 128) VMEM tile; the tile's partial loss sum is
                        broadcast across all 128 lanes (unmasked lane-dense
                        store); the wrapper reads lane 0 and finishes the
                        reduction.
    """
    a = a_ref[...].astype(jnp.float32)
    p = p_ref[...].astype(jnp.float32)
    n = n_ref[...].astype(jnp.float32)

    dpos = a - p
    dneg = a - n
    # Fused: (a-p)^2 - (a-n)^2, then a SINGLE reduction over D.
    diff = dpos * dpos - dneg * dneg                        # (block_b, D) f32

    if use_mxu_reduce:
        # bf16/f16 inputs: per-vreg DMA time is halved, so the cross-lane
        # (XLU) reduce can become co-critical on v7x.  The MXU is completely
        # idle in this kernel -- let it absorb the D reduction.
        ones = jnp.ones((diff.shape[1], 128), dtype=jnp.float32)
        s = jnp.dot(diff, ones,
                    precision=jax.lax.Precision.HIGHEST,
                    preferred_element_type=jnp.float32)[:, 0:1]   # (block_b, 1)
    else:
        # f32 inputs: the XLU reduce hides under the (dominant) DMA.
        s = jnp.sum(diff, axis=1, keepdims=True)            # (block_b, 1)

    losses = jnp.maximum(s + margin, 0.0)                   # relu, per row

    if masked:
        # NOTE: the mask must stay AFTER the relu/sum so that padded (garbage)
        # rows of the last ragged tile are zeroed out of the partial sum.
        row = lax.broadcasted_iota(jnp.int32, (block_b, 1), 0)
        valid = (pl.program_id(0) * block_b + row) < batch
        losses = jnp.where(valid, losses, 0.0)

    tile_sum = jnp.sum(losses)                              # scalar partial sum
    out_ref[...] = jnp.full((1, 1, 128), tile_sum, dtype=jnp.float32)


def _choose_block_b(batch, d, itemsize):
    """Byte-targeted batch tile size.

    Per row we budget: 6 double-buffered input rows (3 inputs x 2 pipeline
    buffers) plus ~4 f32 rows of in-kernel temporaries (the three upcasts and
    the fused diff).  The total footprint targets ~45% of physical VMEM, so
    the same code picks ~28 MiB of tiles on v7x and ~57 MiB on v5e/v6e --
    no arbitrary row cap.
    """
    align = 16 if itemsize <= 2 else 8
    if batch <= align:
        return batch                                 # full-dim block is legal
    per_row = 6 * d * itemsize + 4 * d * 4
    target = int(_vmem_capacity_bytes() * 0.45)
    blk = max(align, (target // per_row) // align * align)
    # TODO(synk): add a D-tiled fallback (2-D grid, reduction axis last and
    # "arbitrary", per-row VMEM accumulator) for very large D where even an
    # `align`-row tile times 6 pipeline buffers overflows VMEM.
    if blk >= batch:
        # Tile would swallow the whole batch: split into >= 2 aligned tiles so
        # the "parallel" grid axis can be sharded across both v7x TensorCores.
        half = (((batch + 1) // 2 + align - 1) // align) * align
        blk = half if half < batch else batch
    return blk


def triplet_loss(anchor, positive, negative, margin, size_average=True, *,
                 block_b=None):
    """Pallas TripletLoss forward. anchor/positive/negative: (B, D) floats.

    Tip (largest win on v5e's ~820 GB/s HBM): pass bf16 embeddings -- the
    kernel accepts them and still accumulates in f32.
    """
    assert anchor.shape == positive.shape == negative.shape
    assert anchor.ndim == 2
    B, D = anchor.shape
    itemsize = jnp.dtype(anchor.dtype).itemsize
    align = 16 if itemsize <= 2 else 8

    if block_b is None:
        block_b = _choose_block_b(B, D, itemsize)
    block_b = min(int(block_b), B)
    if block_b != B and block_b % align != 0:
        raise ValueError(f"block_b must be a multiple of {align}, got {block_b}")

    num_tiles = pl.cdiv(B, block_b)
    masked = (B % block_b) != 0
    use_mxu_reduce = itemsize < 4

    kernel = functools.partial(_triplet_loss_kernel, margin=float(margin),
                               block_b=block_b, batch=B, masked=masked,
                               use_mxu_reduce=use_mxu_reduce)

    emb_spec = pl.BlockSpec((block_b, D), lambda i: (i, 0))

    # Explicit VMEM budget: 3 inputs x 2 pipeline buffers, plus real headroom
    # for the f32 upcast temporaries (a/p/n upcasts + fused diff) so the bf16
    # path never spills, clamped to the chip's physical VMEM.
    tile_bytes = block_b * D * itemsize
    f32_scratch = 4 * block_b * D * 4
    vmem_limit = 6 * tile_bytes + f32_scratch + (4 << 20)
    vmem_limit = int(min(_vmem_capacity_bytes(), max(16 << 20, vmem_limit)))

    partials = pl.pallas_call(
        kernel,
        out_shape=jax.ShapeDtypeStruct((num_tiles, 1, 128), jnp.float32),
        grid_spec=pltpu.PrefetchScalarGridSpec(
            num_scalar_prefetch=0,
            grid=(num_tiles,),
            in_specs=[emb_spec, emb_spec, emb_spec],
            out_specs=pl.BlockSpec((1, 1, 128), lambda i: (i, 0, 0)),
        ),
        compiler_params=pltpu.CompilerParams(
            dimension_semantics=("parallel",),   # independent tiles -> both TCs on v7x
            vmem_limit_bytes=vmem_limit,
        ),
    )(anchor, positive, negative)

    total = jnp.sum(partials[:, 0, 0])
    if size_average:
        return total / jnp.float32(B)
    return total


def triplet_loss_ref(anchor, positive, negative, margin, size_average=True):
    """Pure-JAX reference matching the PyTorch forward (f32 math)."""
    a = anchor.astype(jnp.float32)
    p = positive.astype(jnp.float32)
    n = negative.astype(jnp.float32)
    dp = jnp.sum((a - p) ** 2, axis=1)
    dn = jnp.sum((a - n) ** 2, axis=1)
    losses = jax.nn.relu(dp - dn + margin)
    return jnp.mean(losses) if size_average else jnp.sum(losses)


if __name__ == "__main__":
    key = jax.random.PRNGKey(0)
    k_a, k_p, k_n = jax.random.split(key, 3)
    margin = 1.0

    # f32 inputs, evenly tiled batch (auto block_b -> 2 parallel tiles)
    B, D = 64, 256
    anchor = jax.random.normal(k_a, (B, D), dtype=jnp.float32)
    positive = jax.random.normal(k_p, (B, D), dtype=jnp.float32)
    negative = jax.random.normal(k_n, (B, D), dtype=jnp.float32)

    out = jax.block_until_ready(
        triplet_loss(anchor, positive, negative, margin, size_average=True))
    ref = triplet_loss_ref(anchor, positive, negative, margin, size_average=True)
    assert jnp.allclose(out, ref, rtol=1e-4, atol=1e-4), (out, ref)

    out_sum = jax.block_until_ready(
        triplet_loss(anchor, positive, negative, margin, size_average=False))
    ref_sum = triplet_loss_ref(anchor, positive, negative, margin,
                               size_average=False)
    assert jnp.allclose(out_sum, ref_sum, rtol=1e-4, atol=1e-3), (out_sum, ref_sum)

    # ragged batch: last tile is partial and row-masked inside the kernel
    Br = 24
    out_r = jax.block_until_ready(
        triplet_loss(anchor[:Br], positive[:Br], negative[:Br], margin,
                     size_average=True, block_b=16))
    ref_r = triplet_loss_ref(anchor[:Br], positive[:Br], negative[:Br], margin,
                             size_average=True)
    assert jnp.allclose(out_r, ref_r, rtol=1e-4, atol=1e-4), (out_r, ref_r)

    # bf16 inputs: halves HBM traffic; D-reduction goes through the MXU,
    # accumulation stays f32
    a16 = anchor.astype(jnp.bfloat16)
    p16 = positive.astype(jnp.bfloat16)
    n16 = negative.astype(jnp.bfloat16)
    out_bf = jax.block_until_ready(
        triplet_loss(a16, p16, n16, margin, size_average=True))
    ref_bf = triplet_loss_ref(a16, p16, n16, margin, size_average=True)
    assert jnp.allclose(out_bf, ref_bf, rtol=1e-3, atol=1e-3), (out_bf, ref_bf)

    print("KERNEL_OK")
</pallas_src>

<mosaic_0001>
module attributes {stable_mosaic.version = 11 : i64} {
  func.func @_triplet_loss_kernel(%arg0: i32, %arg1: memref<32x256xf32, #tpu.memory_space<vmem>>, %arg2: memref<32x256xf32, #tpu.memory_space<vmem>>, %arg3: memref<32x256xf32, #tpu.memory_space<vmem>>, %arg4: memref<1x1x128xf32, #tpu.memory_space<vmem>>) attributes {dimension_semantics = [#tpu.dimension_semantics<parallel>], iteration_bounds = array<i64: 2>, scalar_prefetch = 0 : i64, scratch_operands = 0 : i64, tpu.core_type = #tpu.core_type<tc>, window_params = [{transform_indices = @transform_0, window_bounds = array<i64: 32, 256>}, {transform_indices = @transform_1, window_bounds = array<i64: 32, 256>}, {transform_indices = @transform_2, window_bounds = array<i64: 32, 256>}, {transform_indices = @transform_3, window_bounds = array<i64: 1, 1, 128>}]} {
    %c0 = arith.constant 0 : index
    %c0_0 = arith.constant 0 : index
    %0 = vector.load %arg1[%c0, %c0_0] : memref<32x256xf32, #tpu.memory_space<vmem>>, vector<32x256xf32>
    %c0_1 = arith.constant 0 : index
    %c0_2 = arith.constant 0 : index
    %1 = vector.load %arg2[%c0_1, %c0_2] : memref<32x256xf32, #tpu.memory_space<vmem>>, vector<32x256xf32>
    %c0_3 = arith.constant 0 : index
    %c0_4 = arith.constant 0 : index
    %2 = vector.load %arg3[%c0_3, %c0_4] : memref<32x256xf32, #tpu.memory_space<vmem>>, vector<32x256xf32>
    %3 = arith.subf %0, %1 : vector<32x256xf32>
    %4 = arith.subf %0, %2 : vector<32x256xf32>
    %5 = arith.mulf %3, %3 : vector<32x256xf32>
    %6 = arith.mulf %4, %4 : vector<32x256xf32>
    %7 = arith.subf %5, %6 : vector<32x256xf32>
    %cst = arith.constant dense<0.000000e+00> : vector<32xf32>
    %8 = vector.multi_reduction <add>, %7, %cst [1] : vector<32x256xf32> to vector<32xf32>
    %9 = vector.shape_cast %8 : vector<32xf32> to vector<32x1xf32>
    %cst_5 = arith.constant 1.000000e+00 : f32
    %10 = vector.broadcast %cst_5 : f32 to vector<32x1xf32>
    %11 = arith.addf %9, %10 : vector<32x1xf32>
    %cst_6 = arith.constant 0.000000e+00 : f32
    %12 = vector.broadcast %cst_6 : f32 to vector<32x1xf32>
    %13 = arith.maximumf %11, %12 : vector<32x1xf32>
    %14 = vector.shape_cast %13 : vector<32x1xf32> to vector<1x32x1xf32>
    %cst_7 = arith.constant dense<0.000000e+00> : vector<1xf32>
    %15 = vector.multi_reduction <add>, %14, %cst_7 [1, 2] : vector<1x32x1xf32> to vector<1xf32>
    %16 = vector.shape_cast %15 : vector<1xf32> to vector<1x1x1xf32>
    %17 = vector.extract %16[0, 0, 0] : f32 from vector<1x1x1xf32>
    %18 = vector.broadcast %17 : f32 to vector<1x1x128xf32>
    %c0_8 = arith.constant 0 : index
    %c0_9 = arith.constant 0 : index
    %c0_10 = arith.constant 0 : index
    %19 = vector.load %arg4[%c0_8, %c0_9, %c0_10] : memref<1x1x128xf32, #tpu.memory_space<vmem>>, vector<1x1x128xf32>
    tpu.vector_store %arg4[%c0_8, %c0_9, %c0_10], %18 {strides = array<i32>} : memref<1x1x128xf32, #tpu.memory_space<vmem>>, vector<1x1x128xf32>,
    return
  }
  func.func @transform_0(%arg0: i32) -> (i32, i32) {
    %c0_i32 = arith.constant 0 : i32
    %c0_i32_0 = arith.constant 0 : i32
    return %arg0, %c0_i32 : i32, i32
  }
  func.func @transform_1(%arg0: i32) -> (i32, i32) {
    %c0_i32 = arith.constant 0 : i32
    %c0_i32_0 = arith.constant 0 : i32
    return %arg0, %c0_i32 : i32, i32
  }
  func.func @transform_2(%arg0: i32) -> (i32, i32) {
    %c0_i32 = arith.constant 0 : i32
    %c0_i32_0 = arith.constant 0 : i32
    return %arg0, %c0_i32 : i32, i32
  }
  func.func @transform_3(%arg0: i32) -> (i32, i32, i32) {
    %c0_i32 = arith.constant 0 : i32
    %c0_i32_0 = arith.constant 0 : i32
    %c0_i32_1 = arith.constant 0 : i32
    return %arg0, %c0_i32, %c0_i32_0 : i32, i32, i32
  }
}

</mosaic_0001>

<llo_original>
// kernel: tpu_custom_call.1
$region0: #{tpu_custom_call.1}
  #allocation0 [shape = 'u32[]', space=smem, size = 0x4, offset = 0x4, fixed_abs, tag = 'smem constant byte address 0x4 - core index']
  #allocation1 [shape = 'u32[144,128]{1,0:T(1,128)}', space=vmem, size = 0x12000, scoped, tag = 'internal scratch']
  %s0 = inlined_call_operand.hbm [shape: f32[64,256], index: 0, kind: input, shape index: {}]
  %s1 = inlined_call_operand.hbm [shape: f32[64,256], index: 1, kind: input, shape index: {}]
  %s2 = inlined_call_operand.hbm [shape: f32[64,256], index: 2, kind: input, shape index: {}]
  %s3 = inlined_call_operand.hbm [shape: f32[2,1,128], index: 3, kind: output, shape index: {}]
  %s4 = sld [smem:[#allocation0]]
  $region57: #{tpu_custom_call.1} parent=0
    _
  %s6 = ssub.s32 1, %s4
  %s7 = scalar_select 0, %s6, %s4
  $region1: #{tpu_custom_call.1} parent=0
    #allocation2 [shape = 'u8[65536]{0}', space=vmem, size = 0x10000, scoped, tag = 'input window, operand 0']
    #allocation3 [shape = 's32[2]{0}', space=sflag, size = 0x8, scoped, tag = 'scoped memory for tpu_custom_call.1']
    #allocation4 [shape = 's32[2]{0}', space=sflag, size = 0x8, scoped, tag = 'scoped memory for tpu_custom_call.1']
    #allocation5 [shape = 'u8[65536]{0}', space=vmem, size = 0x10000, scoped, tag = 'input window, operand 1']
    #allocation6 [shape = 's32[2]{0}', space=sflag, size = 0x8, scoped, tag = 'scoped memory for tpu_custom_call.1']
    #allocation7 [shape = 'u8[65536]{0}', space=vmem, size = 0x10000, scoped, tag = 'input window, operand 2']
    #allocation8 [shape = 'u8[1024]{0}', space=vmem, size = 0x400, scoped, tag = 'output window, operand 0']
    %8 = vsyncpa [#allocation3], 0
    %s9 = scalar_lea.sflag [#allocation3], 1
    %10 = vsyncpa %s9, 0
    %11 = vsyncpa [#allocation6], 0
    %s12 = scalar_lea.sflag [#allocation6], 1
    %13 = vsyncpa %s12, 0
    %14 = vsyncpa [#allocation4], 0
    %s15 = scalar_lea.sflag [#allocation4], 1
    %16 = vsyncpa %s15, 0
    loop: start=0, step=1, limit=4
    $region2: #{tpu_custom_call.1} parent=1 // loop_pre_header
      _
    $region3: #{tpu_custom_call.1} parent=1 // loop_header
      %s18 = sphi 0, %s22
      %p19 = scmp.ge.s32.totalorder %s18, 4
      %s28 = sphi 0, %s30
      %s31 = sphi 0, %s28
      %s32 = sphi 0, %s31
      %s48 = sphi 0, %s32
      %s54 = sphi 0, %s56
      %s57 = sphi 0, %s54
      %s58 = sphi 0, %s57
      %s74 = sphi 0, %s58
      %s80 = sphi 0, %s82
      %s83 = sphi 0, %s80
      %s84 = sphi 0, %s83
      %s100 = sphi 0, %s84
      %s106 = sphi 0, %s108
      %s109 = sphi 0, %s106
      %s110 = sphi 0, %s109
      %s126 = sphi 0, %s110
    $region4: #{tpu_custom_call.1} parent=1 // loop_header_branch
      %21 = sbr.rel (%p19) target = $region8
    $region5: #{tpu_custom_call.1} parent=1 // loop_body
      %s23 = ssub.s32 %s18, 1
      %s24 = ssub.s32 %s18, 2
      %s25 = sadd.s32 %s18, 1
      %s26 = ssub.s32 %s18, %s25
      %p27 = scmp.eq.s32.totalorder %s26, 0
      %s29 = sadd.s32 %s28, 1
      %s30 = scalar_select %p27, %s28, %s29
      %p33 = pneg %p27
      %p34 = scmp.eq.s32.totalorder %s18, 1
      %p35 = por %p33, %p34
      %p36 = scmp.ne.s32.totalorder %s28, %s31
      %p37 = scmp.eq.s32.totalorder %s18, 0
      %p38 = por %p36, %p37
      %p39 = scmp.ne.s32.totalorder %s28, %s31
      %p40 = scmp.eq.s32.totalorder %s23, 1
      %p41 = por %p39, %p40
      %p42 = scmp.ne.s32.totalorder %s31, %s32
      %p43 = scmp.eq.s32.totalorder %s23, 0
      %p44 = por %p42, %p43
      %p45 = scmp.ne.s32.totalorder %s31, %s32
      %p46 = scmp.eq.s32.totalorder %s24, 1
      %p47 = por %p45, %p46
      %p49 = scmp.ne.s32.totalorder %s32, %s48
      %p50 = scmp.eq.s32.totalorder %s24, 0
      %p51 = por %p49, %p50
      %s52 = ssub.s32 %s18, %s25
      %p53 = scmp.eq.s32.totalorder %s52, 0
      %s55 = sadd.s32 %s54, 1
      %s56 = scalar_select %p53, %s54, %s55
      %p59 = pneg %p53
      %p60 = scmp.eq.s32.totalorder %s18, 1
      %p61 = por %p59, %p60
      %p62 = scmp.ne.s32.totalorder %s54, %s57
      %p63 = scmp.eq.s32.totalorder %s18, 0
      %p64 = por %p62, %p63
      %p65 = scmp.ne.s32.totalorder %s54, %s57
      %p66 = scmp.eq.s32.totalorder %s23, 1
      %p67 = por %p65, %p66
      %p68 = scmp.ne.s32.totalorder %s57, %s58
      %p69 = scmp.eq.s32.totalorder %s23, 0
      %p70 = por %p68, %p69
      %p71 = scmp.ne.s32.totalorder %s57, %s58
      %p72 = scmp.eq.s32.totalorder %s24, 1
      %p73 = por %p71, %p72
      %p75 = scmp.ne.s32.totalorder %s58, %s74
      %p76 = scmp.eq.s32.totalorder %s24, 0
      %p77 = por %p75, %p76
      %s78 = ssub.s32 %s18, %s25
      %p79 = scmp.eq.s32.totalorder %s78, 0
      %s81 = sadd.s32 %s80, 1
      %s82 = scalar_select %p79, %s80, %s81
      %p85 = pneg %p79
      %p86 = scmp.eq.s32.totalorder %s18, 1
      %p87 = por %p85, %p86
      %p88 = scmp.ne.s32.totalorder %s80, %s83
      %p89 = scmp.eq.s32.totalorder %s18, 0
      %p90 = por %p88, %p89
      %p91 = scmp.ne.s32.totalorder %s80, %s83
      %p92 = scmp.eq.s32.totalorder %s23, 1
      %p93 = por %p91, %p92
      %p94 = scmp.ne.s32.totalorder %s83, %s84
      %p95 = scmp.eq.s32.totalorder %s23, 0
      %p96 = por %p94, %p95
      %p97 = scmp.ne.s32.totalorder %s83, %s84
      %p98 = scmp.eq.s32.totalorder %s24, 1
      %p99 = por %p97, %p98
      %p101 = scmp.ne.s32.totalorder %s84, %s100
      %p102 = scmp.eq.s32.totalorder %s24, 0
      %p103 = por %p101, %p102
      %s104 = ssub.s32 %s18, %s25
      %p105 = scmp.eq.s32.totalorder %s104, 0
      %s107 = sadd.s32 %s106, 1
      %s108 = scalar_select %p105, %s106, %s107
      %p111 = pneg %p105
      %p112 = scmp.eq.s32.totalorder %s18, 1
      %p113 = por %p111, %p112
      %p114 = scmp.ne.s32.totalorder %s106, %s109
      %p115 = scmp.eq.s32.totalorder %s18, 0
      %p116 = por %p114, %p115
      %p117 = scmp.ne.s32.totalorder %s106, %s109
      %p118 = scmp.eq.s32.totalorder %s23, 1
      %p119 = por %p117, %p118
      %p120 = scmp.ne.s32.totalorder %s109, %s110
      %p121 = scmp.eq.s32.totalorder %s23, 0
      %p122 = por %p120, %p121
      %p123 = scmp.ne.s32.totalorder %s109, %s110
      %p124 = scmp.eq.s32.totalorder %s24, 1
      %p125 = por %p123, %p124
      %p127 = scmp.ne.s32.totalorder %s110, %s126
      %p128 = scmp.eq.s32.totalorder %s24, 0
      %p129 = por %p127, %p128
      %p130 = scmp.le.s32.totalorder 1, %s18
      %p131 = scmp.lt.s32.totalorder %s18, 3
      %p132 = pnand %p130, %p131
      %p133 = pneg %p132
      // Predicated region
      $region9: #{tpu_custom_call.1} parent=5 // pred_check
        _
      $region10: #{tpu_custom_call.1} parent=5 // pred_check_branch
        %135 = sbr.rel (%p132) target = $region12
      $region11: #{tpu_custom_call.1} parent=5 // pred_region
        %s136 = ssub.s32 %s18, 1
      $region12: #{tpu_custom_call.1} parent=5 // pred_fallthru
        _
      %p137 = scmp.lt.s32.totalorder %s18, 2
      // Predicated region
      $region13: #{tpu_custom_call.1} parent=5 // pred_check
        %p138 = pneg %p137
      $region14: #{tpu_custom_call.1} parent=5 // pred_check_branch
        %140 = sbr.rel (%p138) target = $region16
      $region15: #{tpu_custom_call.1} parent=5 // pred_region
        // Predicated region
        $region17: #{tpu_custom_call.1} parent=15 // pred_check
          %p141 = pneg %p38
        $region18: #{tpu_custom_call.1} parent=15 // pred_check_branch
          %143 = sbr.rel (%p141) target = $region20
        $region19: #{tpu_custom_call.1} parent=15 // pred_region
          %s144 = sand.u32 %s28, 1
          %s145 = scalar_lea.sflag [#allocation3], %s144
          %s146 = sand.u32 %s28, 1
          %s147 = smul.addr %s146, 64
          %s148 = scalar_lea.vmem [#allocation2], %s147
          %s149 = smul.u32 4, %s18
          %s151 = ssub.s32 1024, 1024
          %152 = vsyncadd %s145, %s151
          %s153 = smul.addr %s149, 2
          %s154 = smul.addr %s153, 128
          %s155 = scalar_lea.hbm %s0, %s154
          %s156 = sshll.u32 %s148, 4
          %s157 = int_to_ptr.vmem [resolvable:$true] %s156
          %162 = dma.hbm_to_vmem [thread:$0]  %s155, 1024, %s157, %s145, 256, 256, 16
        $region20: #{tpu_custom_call.1} parent=15 // pred_fallthru
          _
        // Predicated region
        $region21: #{tpu_custom_call.1} parent=15 // pred_check
          %p163 = pneg %p64
        $region22: #{tpu_custom_call.1} parent=15 // pred_check_branch
          %165 = sbr.rel (%p163) target = $region24
        $region23: #{tpu_custom_call.1} parent=15 // pred_region
          %s166 = sand.u32 %s18, 1
          %s167 = scalar_lea.sflag [#allocation6], %s166
          %s168 = sand.u32 %s54, 1
          %s169 = smul.addr %s168, 64
          %s170 = scalar_lea.vmem [#allocation5], %s169
          %s171 = smul.u32 4, %s18
          %s173 = ssub.s32 1024, 1024
          %174 = vsyncadd %s167, %s173
          %s175 = smul.addr %s171, 2
          %s176 = smul.addr %s175, 128
          %s177 = scalar_lea.hbm %s1, %s176
          %s178 = sshll.u32 %s170, 4
          %s179 = int_to_ptr.vmem [resolvable:$true] %s178
          %184 = dma.hbm_to_vmem [thread:$0]  %s177, 1024, %s179, %s167, 256, 256, 16
        $region24: #{tpu_custom_call.1} parent=15 // pred_fallthru
          _
        // Predicated region
        $region25: #{tpu_custom_call.1} parent=15 // pred_check
          %p185 = pneg %p90
        $region26: #{tpu_custom_call.1} parent=15 // pred_check_branch
          %187 = sbr.rel (%p185) target = $region28
        $region27: #{tpu_custom_call.1} parent=15 // pred_region
          %s188 = sand.u32 %s18, 1
          %s189 = scalar_lea.sflag [#allocation6], %s188
          %s190 = sand.u32 %s80, 1
          %s191 = smul.addr %s190, 64
          %s192 = scalar_lea.vmem [#allocation7], %s191
          %s193 = smul.u32 4, %s18
          %s195 = ssub.s32 1024, 1024
          %196 = vsyncadd %s189, %s195
          %s197 = smul.addr %s193, 2
          %s198 = smul.addr %s197, 128
          %s199 = scalar_lea.hbm %s2, %s198
          %s200 = sshll.u32 %s192, 4
          %s201 = int_to_ptr.vmem [resolvable:$true] %s200
          %206 = dma.hbm_to_vmem [thread:$0]  %s199, 1024, %s201, %s189, 256, 256, 16
        $region28: #{tpu_custom_call.1} parent=15 // pred_fallthru
          _
      $region16: #{tpu_custom_call.1} parent=5 // pred_fallthru
        _
      %p207 = scmp.le.s32.totalorder 1, %s18
      %p208 = scmp.lt.s32.totalorder %s18, 3
      %p209 = pnand %p207, %p208
      %p210 = pneg %p209
      // Predicated region
      $region29: #{tpu_custom_call.1} parent=5 // pred_check
        _
      $region30: #{tpu_custom_call.1} parent=5 // pred_check_branch
        %212 = sbr.rel (%p209) target = $region32
      $region31: #{tpu_custom_call.1} parent=5 // pred_region
        %s213 = ssub.s32 %s18, 1
        %s214 = sand.u32 %s31, 1
        %s215 = scalar_lea.sflag [#allocation3], %s214
        %s216 = sand.u32 %s31, 1
        %s217 = smul.addr %s216, 64
        %s218 = scalar_lea.vmem [#allocation2], %s217
        // Predicated region
        $region33: #{tpu_custom_call.1} parent=31 // pred_check
          %p219 = pneg %p44
        $region34: #{tpu_custom_call.1} parent=31 // pred_check_branch
          %221 = sbr.rel (%p219) target = $region36
        $region35: #{tpu_custom_call.1} parent=31 // pred_region
          %222 = dma.done %s215, 1024
        $region36: #{tpu_custom_call.1} parent=31 // pred_fallthru
          _
        %s223 = sand.u32 %s23, 1
        %s224 = scalar_lea.sflag [#allocation6], %s223
        %s225 = sand.u32 %s57, 1
        %s226 = smul.addr %s225, 64
        %s227 = scalar_lea.vmem [#allocation5], %s226
        // Predicated region
        $region37: #{tpu_custom_call.1} parent=31 // pred_check
          %p228 = pneg %p70
        $region38: #{tpu_custom_call.1} parent=31 // pred_check_branch
          %230 = sbr.rel (%p228) target = $region40
        $region39: #{tpu_custom_call.1} parent=31 // pred_region
          %231 = dma.done %s224, 1024
        $region40: #{tpu_custom_call.1} parent=31 // pred_fallthru
          _
        %s232 = sand.u32 %s23, 1
        %s233 = scalar_lea.sflag [#allocation6], %s232
        %s234 = sand.u32 %s83, 1
        %s235 = smul.addr %s234, 64
        %s236 = scalar_lea.vmem [#allocation7], %s235
        // Predicated region
        $region41: #{tpu_custom_call.1} parent=31 // pred_check
          %p237 = pneg %p96
        $region42: #{tpu_custom_call.1} parent=31 // pred_check_branch
          %239 = sbr.rel (%p237) target = $region44
        $region43: #{tpu_custom_call.1} parent=31 // pred_region
          %240 = dma.done %s233, 1024
        $region44: #{tpu_custom_call.1} parent=31 // pred_fallthru
          _
        %s241 = sand.u32 %s31, 1
        %s242 = scalar_lea.sflag [#allocation3], %s241
        %s243 = sand.u32 %s31, 1
        %s244 = smul.addr %s243, 64
        %s245 = scalar_lea.vmem [#allocation2], %s244
        %p246 = pneg %p44
        %p247 = pneg %p41
        %s248 = sand.u32 %s23, 1
        %s249 = scalar_lea.sflag [#allocation6], %s248
        %s250 = sand.u32 %s57, 1
        %s251 = smul.addr %s250, 64
        %s252 = scalar_lea.vmem [#allocation5], %s251
        %p253 = pneg %p70
        %p254 = pneg %p67
        %s255 = sand.u32 %s23, 1
        %s256 = scalar_lea.sflag [#allocation6], %s255
        %s257 = sand.u32 %s83, 1
        %s258 = smul.addr %s257, 64
        %s259 = scalar_lea.vmem [#allocation7], %s258
        %p260 = pneg %p96
        %p261 = pneg %p93
        %p262 = pneg %p122
        %p263 = pneg %p119
        %s264 = sand.u32 %s109, 1
        %s265 = scalar_lea.sflag [#allocation4], %s264
        %s266 = sand.u32 %s109, 1
        %s267 = scalar_lea.vmem [#allocation8], %s266
        %s268 = smul.u32 4, %s23
        %s269 = smul.u32 4, %s23
        %s270 = smul.u32 4, %s23
        %v271 = vld [vmem:[%s218] sm:$0xff]
        %v272 = vld [vmem:[%s218 + $0x8] sm:$0xff]
        %v273 = vld [vmem:[%s218 + $0x10] sm:$0xff]
        %v274 = vld [vmem:[%s218 + $0x18] sm:$0xff]
        %v275 = vld [vmem:[%s218 + $0x20] sm:$0xff]
        %v276 = vld [vmem:[%s218 + $0x28] sm:$0xff]
        %v277 = vld [vmem:[%s218 + $0x30] sm:$0xff]
        %v278 = vld [vmem:[%s218 + $0x38] sm:$0xff]
        %v279 = vld [vmem:[%s227] sm:$0xff]
        %v280 = vld [vmem:[%s227 + $0x8] sm:$0xff]
        %v281 = vld [vmem:[%s227 + $0x10] sm:$0xff]
        %v282 = vld [vmem:[%s227 + $0x18] sm:$0xff]
        %v283 = vld [vmem:[%s227 + $0x20] sm:$0xff]
        %v284 = vld [vmem:[%s227 + $0x28] sm:$0xff]
        %v285 = vld [vmem:[%s227 + $0x30] sm:$0xff]
        %v286 = vld [vmem:[%s227 + $0x38] sm:$0xff]
        %v287 = vld [vmem:[%s236] sm:$0xff]
        %v288 = vld [vmem:[%s236 + $0x8] sm:$0xff]
        %v289 = vld [vmem:[%s236 + $0x10] sm:$0xff]
        %v290 = vld [vmem:[%s236 + $0x18] sm:$0xff]
        %v291 = vld [vmem:[%s236 + $0x20] sm:$0xff]
        %v292 = vld [vmem:[%s236 + $0x28] sm:$0xff]
        %v293 = vld [vmem:[%s236 + $0x30] sm:$0xff]
        %v294 = vld [vmem:[%s236 + $0x38] sm:$0xff]
        %v295 = vsub.f32 %v271, %v279
        %v296 = vsub.f32 %v272, %v280
        %v297 = vsub.f32 %v273, %v281
        %v298 = vsub.f32 %v274, %v282
        %v299 = vsub.f32 %v275, %v283
        %v300 = vsub.f32 %v276, %v284
        %v301 = vsub.f32 %v277, %v285
        %v302 = vsub.f32 %v278, %v286
        %v303 = vsub.f32 %v271, %v287
        %v304 = vsub.f32 %v272, %v288
        %v305 = vsub.f32 %v273, %v289
        %v306 = vsub.f32 %v274, %v290
        %v307 = vsub.f32 %v275, %v291
        %v308 = vsub.f32 %v276, %v292
        %v309 = vsub.f32 %v277, %v293
        %v310 = vsub.f32 %v278, %v294
        %v311 = vmul.f32 %v295, %v295
        %v312 = vmul.f32 %v296, %v296
        %v313 = vmul.f32 %v297, %v297
        %v314 = vmul.f32 %v298, %v298
        %v315 = vmul.f32 %v299, %v299
        %v316 = vmul.f32 %v300, %v300
        %v317 = vmul.f32 %v301, %v301
        %v318 = vmul.f32 %v302, %v302
        %v319 = vmul.f32 %v303, %v303
        %v320 = vmul.f32 %v304, %v304
        %v321 = vmul.f32 %v305, %v305
        %v322 = vmul.f32 %v306, %v306
        %v323 = vmul.f32 %v307, %v307
        %v324 = vmul.f32 %v308, %v308
        %v325 = vmul.f32 %v309, %v309
        %v326 = vmul.f32 %v310, %v310
        %v327 = vsub.f32 %v311, %v319
        %v328 = vsub.f32 %v312, %v320
        %v329 = vsub.f32 %v313, %v321
        %v330 = vsub.f32 %v314, %v322
        %v331 = vsub.f32 %v315, %v323
        %v332 = vsub.f32 %v316, %v324
        %v333 = vsub.f32 %v317, %v325
        %v334 = vsub.f32 %v318, %v326
        %v335 = vadd.f32 %v327, %v328
        %336 = vadd.xlane.f32.xlu0 %v335
        %v337 = vpop.xlane.xlu0 %336
        %v338 = vadd.f32 %v329, %v330
        %339 = vadd.xlane.f32.xlu0 %v338
        %v340 = vpop.xlane.xlu0 %339
        %v341 = vadd.f32 %v331, %v332
        %342 = vadd.xlane.f32.xlu0 %v341
        %v343 = vpop.xlane.xlu0 %342
        %v344 = vadd.f32 %v333, %v334
        %345 = vadd.xlane.f32.xlu0 %v344
        %v346 = vpop.xlane.xlu0 %345
        %v347 = vadd.f32 %v337, 1.0
        %v348 = vadd.f32 %v340, 1.0
        %v349 = vadd.f32 %v343, 1.0
        %v350 = vadd.f32 %v346, 1.0
        %v351 = vmax.f32 %v347, 0.0
        %v352 = vmax.f32 %v348, 0.0
        %v353 = vmax.f32 %v349, 0.0
        %v354 = vmax.f32 %v350, 0.0
        %vm355 = vcmask 7168
        %v356 = vsel %vm355, %v351, 0.0
        %v357 = vsel %vm355, %v352, 0.0
        %v358 = vadd.f32 %v356, %v357
        %v359 = vsel %vm355, %v353, 0.0
        %v360 = vadd.f32 %v358, %v359
        %v361 = vsel %vm355, %v354, 0.0
        %v362 = vadd.f32 %v360, %v361
        %363 = vadd.xlane.f32.xlu0 %v362
        %v364 = vpop.xlane.xlu0 %363
        %v365 = vrot.slane %v364, 4
        %v366 = vadd.f32 %v364, %v365
        %v367 = vrot.slane %v366, 2
        %v368 = vadd.f32 %v366, %v367
        %v369 = vrot.slane %v368, 1
        %v370 = vadd.f32 %v368, %v369
        %s371 = vtos %v370
        %v372 = vstv %s371
        %373 = vst [vmem:[%s267] sm:$0x1] %v372
        %s374 = sand.u32 %s109, 1
        %s375 = scalar_lea.sflag [#allocation4], %s374
        %s376 = sand.u32 %s109, 1
        %s377 = scalar_lea.vmem [#allocation8], %s376
        // Predicated region
        $region45: #{tpu_custom_call.1} parent=31 // pred_check
          %p378 = pneg %p119
        $region46: #{tpu_custom_call.1} parent=31 // pred_check_branch
          %380 = sbr.rel (%p378) target = $region48
        $region47: #{tpu_custom_call.1} parent=31 // pred_region
          %s382 = ssub.s32 16, 16
          %383 = vsyncadd %s375, %s382
          %s384 = smul.addr %s23, 16
          %s385 = scalar_lea.hbm %s3, %s384
          %s387 = sshll.u32 %s377, 4
          %s388 = int_to_ptr.vmem [resolvable:$true] %s387
          %390 = dma.vmem_to_hbm [thread:$0]  %s388, 16, %s385, %s375
        $region48: #{tpu_custom_call.1} parent=31 // pred_fallthru
          _
      $region32: #{tpu_custom_call.1} parent=5 // pred_fallthru
        _
      %p391 = scmp.le.s32.totalorder 2, %s18
      // Predicated region
      $region49: #{tpu_custom_call.1} parent=5 // pred_check
        %p392 = pneg %p391
      $region50: #{tpu_custom_call.1} parent=5 // pred_check_branch
        %394 = sbr.rel (%p392) target = $region52
      $region51: #{tpu_custom_call.1} parent=5 // pred_region
        %s395 = ssub.s32 %s18, 2
        // Predicated region
        $region53: #{tpu_custom_call.1} parent=51 // pred_check
          %p396 = pneg %p125
        $region54: #{tpu_custom_call.1} parent=51 // pred_check_branch
          %398 = sbr.rel (%p396) target = $region56
        $region55: #{tpu_custom_call.1} parent=51 // pred_region
          %s399 = sand.u32 %s110, 1
          %s400 = scalar_lea.sflag [#allocation4], %s399
          %s401 = sand.u32 %s110, 1
          %s402 = scalar_lea.vmem [#allocation8], %s401
          %403 = dma.done %s400, 16
        $region56: #{tpu_custom_call.1} parent=51 // pred_fallthru
          _
      $region52: #{tpu_custom_call.1} parent=5 // pred_fallthru
        _
    $region6: #{tpu_custom_call.1} parent=1 // loop_footer
      %s22 = sadd.s32 1, %s18
    $region7: #{tpu_custom_call.1} parent=1 // loop_footer_branch
      %17 = sbr.rel target = $region3
    $region8: #{tpu_custom_call.1} parent=1 // loop_exit
      _
    %404 = vsyncpa [#allocation3], 1
    %s405 = scalar_lea.sflag [#allocation3], 1
    %406 = vsyncpa %s405, 1
    %407 = vsyncpa [#allocation6], 1
    %s408 = scalar_lea.sflag [#allocation6], 1
    %409 = vsyncpa %s408, 1
    %410 = vsyncpa [#allocation4], 1
    %s411 = scalar_lea.sflag [#allocation4], 1
    %412 = vsyncpa %s411, 1

</llo_original>
